<compile_context>
chip_gen: v7x
topology: tpu7x:2x2x1
jax: 0.10.0
libtpu: 0.0.40
codegen_flags: <defaults>
</compile_context>

<pallas_src>
import functools

import jax
import jax.numpy as jnp
from jax import lax
from jax.experimental import pallas as pl
from jax.experimental.pallas import tpu as pltpu


def _rab_kernel(x_ref, wqkv_ref, wout_ref, bout_ref, g_ref, b_ref, hmask_ref,
                o_ref, *, eps):
    Nb, C, L = x_ref.shape
    HD = wout_ref.shape[0]                                    # heads * dim_head

    x = x_ref[...].astype(jnp.float32)                        # (Nb, C, L)

    # ---- normalization over channels (torch: dim=1, unbiased=False) ----
    mean = jnp.mean(x, axis=1, keepdims=True)                 # (Nb, 1, L)
    xc = x - mean
    var = jnp.mean(xc * xc, axis=1, keepdims=True)            # two-pass variance
    xn = xc * lax.rsqrt(var + eps) * g_ref[...].astype(jnp.float32) \
        + b_ref[...].astype(jnp.float32)                      # g/b: (C, 1)

    # ---- lane-dense layout for the projections / attention ----
    xt = jnp.swapaxes(xn, 1, 2)                               # (Nb, L, C)

    # qkv projection: one lane-dense MXU dot (q scale pre-folded into weight).
    mxu_dt = wqkv_ref.dtype
    qkv = jnp.dot(xt.astype(mxu_dt).reshape(Nb * L, C), wqkv_ref[...],
                  preferred_element_type=jnp.float32)         # (Nb*L, 3*HD)
    qkv = qkv.reshape(Nb, L, 3 * HD)

    # ---- softmax(k) over length, lane-dense (HD on lanes, reduce axis=1).
    #      Normalization deferred: rescale ctx rows by 1/sum afterwards. ----
    k = qkv[..., 1 * HD:2 * HD]                               # (Nb, L, HD)
    v = qkv[..., 2 * HD:3 * HD]                               # (Nb, L, HD)
    kmax = jnp.max(k, axis=1, keepdims=True)                  # (Nb, 1, HD)
    ke = jnp.exp(k - kmax)
    ksum = jnp.sum(ke, axis=1, keepdims=True)                 # (Nb, 1, HD)

    # ---- linear attention.  Heads stay on the lane axis; per-head structure
    #      is enforced with a block-diagonal (HD, HD) mask on the context. ----
    ctx = jnp.einsum('bnc,bne->bce', ke, v,
                     preferred_element_type=jnp.float32)      # (Nb, HD, HD)
    ctx = ctx * pl.reciprocal(jnp.swapaxes(ksum, 1, 2), approx=False)
    ctx = ctx * hmask_ref[...][None]

    q = qkv[..., 0 * HD:1 * HD]                               # sliced late
    attn = jnp.einsum('bnc,bce->bne', q, ctx,
                      preferred_element_type=jnp.float32)     # (Nb, L, HD)

    # ---- output projection + bias, back to channels-first, residual ----
    y = jnp.dot(attn.astype(wout_ref.dtype).reshape(Nb * L, HD), wout_ref[...],
                preferred_element_type=jnp.float32)           # (Nb*L, C)
    y = jnp.swapaxes(y.reshape(Nb, L, C), 1, 2)               # (Nb, C, L)
    y = y + bout_ref[...].astype(jnp.float32) + x
    o_ref[...] = y.astype(o_ref.dtype)


def residual_attention_block(x, wqkv, wout, bout, g, b, *,
                             heads=4, dim_head=32, eps=1e-5, block_b=None):
    """x: (B, C, L); wqkv: (3*heads*dim_head, C); wout: (C, heads*dim_head);
    bout / g / b: (C,).  Returns (B, C, L) in the native layout."""
    B, C, L = x.shape
    HD = heads * dim_head
    assert wqkv.shape == (3 * HD, C) and wout.shape == (C, HD)
    scale = dim_head ** -0.5

    if block_b is None:
        # Budget f32 temps (qkv dominates at 3*HD floats/token) for the
        # smallest-VMEM generation (v7x: 64 MiB per TC); leave headroom.
        bytes_per_token = 4 * (3 * HD + 2 * HD + 2 * C)
        max_tokens = max(L, (12 << 20) // bytes_per_token)
        block_b = max(1, min(B, max_tokens // L))
        if B >= 2:                     # >=2 grid steps so v7x's 2 TCs both work
            block_b = min(block_b, max(1, B // 2))
        while B % block_b:
            block_b -= 1
    assert B % block_b == 0

    # Small constant-size weight prep (q scale folded into the q columns).
    wdt = wqkv.dtype
    qscale = jnp.concatenate([jnp.full((HD,), scale, wdt),
                              jnp.ones((2 * HD,), wdt)])
    wqkv_t = jnp.transpose(wqkv) * qscale[None, :]            # (C, 3*HD)
    wout_t = jnp.transpose(wout)                              # (HD, C)
    bout2 = bout.reshape(C, 1)
    g2 = g.reshape(C, 1)
    b2 = b.reshape(C, 1)
    head_id = jnp.arange(HD) // dim_head
    hmask = (head_id[:, None] == head_id[None, :]).astype(jnp.float32)

    kernel = functools.partial(_rab_kernel, eps=eps)

    return pl.pallas_call(
        kernel,
        out_shape=jax.ShapeDtypeStruct((B, C, L), x.dtype),
        grid=(B // block_b,),
        in_specs=[
            pl.BlockSpec((block_b, C, L), lambda i: (i, 0, 0)),
            pl.BlockSpec((C, 3 * HD), lambda i: (0, 0)),
            pl.BlockSpec((HD, C), lambda i: (0, 0)),
            pl.BlockSpec((C, 1), lambda i: (0, 0)),
            pl.BlockSpec((C, 1), lambda i: (0, 0)),
            pl.BlockSpec((C, 1), lambda i: (0, 0)),
            pl.BlockSpec((HD, HD), lambda i: (0, 0)),
        ],
        out_specs=pl.BlockSpec((block_b, C, L), lambda i: (i, 0, 0)),
        compiler_params=pltpu.CompilerParams(
            dimension_semantics=("parallel",),
            vmem_limit_bytes=48 * 1024 * 1024),
    )(x, wqkv_t, wout_t, bout2, g2, b2, hmask)


def _reference(x, wqkv, wout, bout, g, b, *, heads=4, dim_head=32, eps=1e-5):
    """Pure-JAX port of the PyTorch ResidualAttentionBlock.forward."""
    B, C, L = x.shape
    HD = heads * dim_head
    scale = dim_head ** -0.5
    mean = jnp.mean(x, axis=1, keepdims=True)
    var = jnp.mean((x - mean) ** 2, axis=1, keepdims=True)
    xn = (x - mean) / jnp.sqrt(var + eps) * g[None, :, None] + b[None, :, None]
    qkv = jnp.einsum('oc,bcl->bol', wqkv, xn)
    q = qkv[:, 0 * HD:1 * HD].reshape(B, heads, dim_head, L) * scale
    k = qkv[:, 1 * HD:2 * HD].reshape(B, heads, dim_head, L)
    v = qkv[:, 2 * HD:3 * HD].reshape(B, heads, dim_head, L)
    k = jax.nn.softmax(k, axis=-1)
    context = jnp.einsum('bhdn,bhen->bhde', k, v)
    out = jnp.einsum('bhde,bhdn->bhen', context, q)
    out = out.reshape(B, HD, L)
    y = jnp.einsum('co,bol->bcl', wout, out) + bout[None, :, None]
    return y + x


if __name__ == "__main__":
    # Shapes consistent with the module: x is (batch, dim, length);
    # LinearAttention defaults heads=4, dim_head=32 -> hidden_dim = 128.
    B, C, L = 2, 32, 16
    heads, dim_head = 4, 32
    HD = heads * dim_head

    key = jax.random.PRNGKey(0)
    kx, kq, ko, kb, kg, kbt = jax.random.split(key, 6)
    x = jax.random.normal(kx, (B, C, L), dtype=jnp.float32)
    wqkv = jax.random.normal(kq, (3 * HD, C), dtype=jnp.float32) * (C ** -0.5)
    wout = jax.random.normal(ko, (C, HD), dtype=jnp.float32) * (HD ** -0.5)
    bout = 0.1 * jax.random.normal(kb, (C,), dtype=jnp.float32)
    g = 1.0 + 0.1 * jax.random.normal(kg, (C,), dtype=jnp.float32)
    b = 0.1 * jax.random.normal(kbt, (C,), dtype=jnp.float32)

    out = residual_attention_block(x, wqkv, wout, bout, g, b,
                                   heads=heads, dim_head=dim_head)
    out = jax.block_until_ready(out)

    ref = _reference(x, wqkv, wout, bout, g, b, heads=heads, dim_head=dim_head)
    assert out.shape == ref.shape == (B, C, L)
    err = float(jnp.max(jnp.abs(out - ref)))
    assert jnp.allclose(out, ref, rtol=1e-3, atol=1e-3), err

    print("KERNEL_OK")
</pallas_src>

<mosaic_0001>
module attributes {stable_mosaic.version = 11 : i64} {
  func.func @_rab_kernel(%arg0: i32, %arg1: memref<1x32x16xf32, #tpu.memory_space<vmem>>, %arg2: memref<32x384xf32, #tpu.memory_space<vmem>>, %arg3: memref<128x32xf32, #tpu.memory_space<vmem>>, %arg4: memref<32x1xf32, #tpu.memory_space<vmem>>, %arg5: memref<32x1xf32, #tpu.memory_space<vmem>>, %arg6: memref<32x1xf32, #tpu.memory_space<vmem>>, %arg7: memref<128x128xf32, #tpu.memory_space<vmem>>, %arg8: memref<1x32x16xf32, #tpu.memory_space<vmem>>) attributes {dimension_semantics = [#tpu.dimension_semantics<parallel>], iteration_bounds = array<i64: 2>, scalar_prefetch = 0 : i64, scratch_operands = 0 : i64, tpu.core_type = #tpu.core_type<tc>, window_params = [{transform_indices = @transform_0, window_bounds = array<i64: 1, 32, 16>}, {pipeline_mode = #tpu.pipeline_mode<synchronous>, transform_indices = @transform_1, window_bounds = array<i64: 32, 384>}, {pipeline_mode = #tpu.pipeline_mode<synchronous>, transform_indices = @transform_2, window_bounds = array<i64: 128, 32>}, {pipeline_mode = #tpu.pipeline_mode<synchronous>, transform_indices = @transform_3, window_bounds = array<i64: 32, 1>}, {pipeline_mode = #tpu.pipeline_mode<synchronous>, transform_indices = @transform_4, window_bounds = array<i64: 32, 1>}, {pipeline_mode = #tpu.pipeline_mode<synchronous>, transform_indices = @transform_5, window_bounds = array<i64: 32, 1>}, {pipeline_mode = #tpu.pipeline_mode<synchronous>, transform_indices = @transform_6, window_bounds = array<i64: 128, 128>}, {transform_indices = @transform_7, window_bounds = array<i64: 1, 32, 16>}]} {
    %c0 = arith.constant 0 : index
    %c0_0 = arith.constant 0 : index
    %c0_1 = arith.constant 0 : index
    %0 = vector.load %arg1[%c0, %c0_0, %c0_1] : memref<1x32x16xf32, #tpu.memory_space<vmem>>, vector<1x32x16xf32>
    %cst = arith.constant dense<0.000000e+00> : vector<1x16xf32>
    %1 = vector.multi_reduction <add>, %0, %cst [1] : vector<1x32x16xf32> to vector<1x16xf32>
    %2 = vector.shape_cast %1 : vector<1x16xf32> to vector<1x1x16xf32>
    %cst_2 = arith.constant 3.200000e+01 : f32
    %3 = vector.broadcast %cst_2 : f32 to vector<1x1x16xf32>
    %4 = arith.divf %2, %3 : vector<1x1x16xf32>
    %5 = vector.broadcast %4 : vector<1x1x16xf32> to vector<1x32x16xf32>
    %6 = arith.subf %0, %5 : vector<1x32x16xf32>
    %7 = arith.mulf %6, %6 : vector<1x32x16xf32>
    %cst_3 = arith.constant dense<0.000000e+00> : vector<1x16xf32>
    %8 = vector.multi_reduction <add>, %7, %cst_3 [1] : vector<1x32x16xf32> to vector<1x16xf32>
    %9 = vector.shape_cast %8 : vector<1x16xf32> to vector<1x1x16xf32>
    %cst_4 = arith.constant 3.200000e+01 : f32
    %10 = vector.broadcast %cst_4 : f32 to vector<1x1x16xf32>
    %11 = arith.divf %9, %10 : vector<1x1x16xf32>
    %cst_5 = arith.constant 9.99999974E-6 : f32
    %12 = vector.broadcast %cst_5 : f32 to vector<1x1x16xf32>
    %13 = arith.addf %11, %12 : vector<1x1x16xf32>
    %14 = math.rsqrt %13 : vector<1x1x16xf32>
    %15 = vector.broadcast %14 : vector<1x1x16xf32> to vector<1x32x16xf32>
    %16 = arith.mulf %6, %15 : vector<1x32x16xf32>
    %c0_6 = arith.constant 0 : index
    %c0_7 = arith.constant 0 : index
    %17 = vector.load %arg5[%c0_6, %c0_7] : memref<32x1xf32, #tpu.memory_space<vmem>>, vector<32x1xf32>
    %18 = vector.shape_cast %17 : vector<32x1xf32> to vector<1x32x1xf32>
    %19 = vector.broadcast %18 : vector<1x32x1xf32> to vector<1x32x16xf32>
    %20 = arith.mulf %16, %19 : vector<1x32x16xf32>
    %c0_8 = arith.constant 0 : index
    %c0_9 = arith.constant 0 : index
    %21 = vector.load %arg6[%c0_8, %c0_9] : memref<32x1xf32, #tpu.memory_space<vmem>>, vector<32x1xf32>
    %22 = vector.shape_cast %21 : vector<32x1xf32> to vector<1x32x1xf32>
    %23 = vector.broadcast %22 : vector<1x32x1xf32> to vector<1x32x16xf32>
    %24 = arith.addf %20, %23 : vector<1x32x16xf32>
    %25 = tpu.transpose %24, [0, 2, 1] : vector<1x32x16xf32> -> vector<1x16x32xf32>
    %26 = vector.shape_cast %25 : vector<1x16x32xf32> to vector<16x32xf32>
    %c0_10 = arith.constant 0 : index
    %c0_11 = arith.constant 0 : index
    %27 = vector.load %arg2[%c0_10, %c0_11] : memref<32x384xf32, #tpu.memory_space<vmem>>, vector<32x384xf32>
    %cst_12 = arith.constant dense<0.000000e+00> : vector<16x384xf32>
    %28 = tpu.matmul %26, %27, %cst_12 {dimension_numbers = #tpu.dot_dimension_numbers<[1], [0], [0], [1], [0, 0, 1, 1], [], []>} : vector<16x32xf32>, vector<32x384xf32>, vector<16x384xf32> -> vector<16x384xf32>
    %29 = vector.shape_cast %28 : vector<16x384xf32> to vector<1x16x384xf32>
    %30 = vector.extract_strided_slice %29 {offsets = [0, 0, 128], sizes = [1, 16, 128], strides = [1, 1, 1]} : vector<1x16x384xf32> to vector<1x16x128xf32>
    %31 = vector.extract_strided_slice %29 {offsets = [0, 0, 256], sizes = [1, 16, 128], strides = [1, 1, 1]} : vector<1x16x384xf32> to vector<1x16x128xf32>
    %cst_13 = arith.constant dense<0xFF800000> : vector<1x128xf32>
    %32 = vector.multi_reduction <maximumf>, %30, %cst_13 [1] : vector<1x16x128xf32> to vector<1x128xf32>
    %33 = vector.shape_cast %32 : vector<1x128xf32> to vector<1x1x128xf32>
    %34 = vector.broadcast %33 : vector<1x1x128xf32> to vector<1x16x128xf32>
    %35 = arith.subf %30, %34 : vector<1x16x128xf32>
    %36 = math.exp %35 : vector<1x16x128xf32>
    %cst_14 = arith.constant dense<0.000000e+00> : vector<1x128xf32>
    %37 = vector.multi_reduction <add>, %36, %cst_14 [1] : vector<1x16x128xf32> to vector<1x128xf32>
    %38 = vector.shape_cast %37 : vector<1x128xf32> to vector<1x1x128xf32>
    "tpu.trace_start"() <{level = 10 : i32, message = "bnc,bne->bce"}> : () -> ()
    %cst_15 = arith.constant dense<0.000000e+00> : vector<1x128x128xf32>
    %39 = tpu.matmul %36, %31, %cst_15 {dimension_numbers = #tpu.dot_dimension_numbers<[1], [1], [2], [2], [0, 0, 0, 2, 1, 2], [0], [0]>} : vector<1x16x128xf32>, vector<1x16x128xf32>, vector<1x128x128xf32> -> vector<1x128x128xf32>
    "tpu.trace_stop"() : () -> ()
    %40 = tpu.transpose %38, [0, 2, 1] : vector<1x1x128xf32> -> vector<1x128x1xf32>
    %41 = tpu.reciprocal %40 : vector<1x128x1xf32> -> vector<1x128x1xf32>
    %42 = vector.broadcast %41 : vector<1x128x1xf32> to vector<1x128x128xf32>
    %43 = arith.mulf %39, %42 : vector<1x128x128xf32>
    %c0_16 = arith.constant 0 : index
    %c0_17 = arith.constant 0 : index
    %44 = vector.load %arg7[%c0_16, %c0_17] : memref<128x128xf32, #tpu.memory_space<vmem>>, vector<128x128xf32>
    %45 = vector.shape_cast %44 : vector<128x128xf32> to vector<1x128x128xf32>
    %46 = arith.mulf %43, %45 : vector<1x128x128xf32>
    %47 = vector.extract_strided_slice %29 {offsets = [0, 0, 0], sizes = [1, 16, 128], strides = [1, 1, 1]} : vector<1x16x384xf32> to vector<1x16x128xf32>
    "tpu.trace_start"() <{level = 10 : i32, message = "bnc,bce->bne"}> : () -> ()
    %cst_18 = arith.constant dense<0.000000e+00> : vector<1x16x128xf32>
    %48 = tpu.matmul %47, %46, %cst_18 {dimension_numbers = #tpu.dot_dimension_numbers<[2], [1], [1], [2], [0, 0, 0, 1, 1, 2], [0], [0]>} : vector<1x16x128xf32>, vector<1x128x128xf32>, vector<1x16x128xf32> -> vector<1x16x128xf32>
    "tpu.trace_stop"() : () -> ()
    %49 = vector.shape_cast %48 : vector<1x16x128xf32> to vector<16x128xf32>
    %c0_19 = arith.constant 0 : index
    %c0_20 = arith.constant 0 : index
    %50 = vector.load %arg3[%c0_19, %c0_20] : memref<128x32xf32, #tpu.memory_space<vmem>>, vector<128x32xf32>
    %cst_21 = arith.constant dense<0.000000e+00> : vector<16x32xf32>
    %51 = tpu.matmul %49, %50, %cst_21 {dimension_numbers = #tpu.dot_dimension_numbers<[1], [0], [0], [1], [0, 0, 1, 1], [], []>} : vector<16x128xf32>, vector<128x32xf32>, vector<16x32xf32> -> vector<16x32xf32>
    %52 = vector.shape_cast %51 : vector<16x32xf32> to vector<1x16x32xf32>
    %53 = tpu.transpose %52, [0, 2, 1] : vector<1x16x32xf32> -> vector<1x32x16xf32>
    %c0_22 = arith.constant 0 : index
    %c0_23 = arith.constant 0 : index
    %54 = vector.load %arg4[%c0_22, %c0_23] : memref<32x1xf32, #tpu.memory_space<vmem>>, vector<32x1xf32>
    %55 = vector.shape_cast %54 : vector<32x1xf32> to vector<1x32x1xf32>
    %56 = vector.broadcast %55 : vector<1x32x1xf32> to vector<1x32x16xf32>
    %57 = arith.addf %53, %56 : vector<1x32x16xf32>
    %58 = arith.addf %57, %0 : vector<1x32x16xf32>
    %c0_24 = arith.constant 0 : index
    %c0_25 = arith.constant 0 : index
    %c0_26 = arith.constant 0 : index
    %59 = vector.load %arg8[%c0_24, %c0_25, %c0_26] : memref<1x32x16xf32, #tpu.memory_space<vmem>>, vector<1x32x16xf32>
    tpu.vector_store %arg8[%c0_24, %c0_25, %c0_26], %58 {strides = array<i32>} : memref<1x32x16xf32, #tpu.memory_space<vmem>>, vector<1x32x16xf32>,
    return
  }
  func.func @transform_0(%arg0: i32) -> (i32, i32, i32) {
    %c0_i32 = arith.constant 0 : i32
    %c0_i32_0 = arith.constant 0 : i32
    %c0_i32_1 = arith.constant 0 : i32
    return %arg0, %c0_i32, %c0_i32_0 : i32, i32, i32
  }
  func.func @transform_1(%arg0: i32) -> (i32, i32) {
    %c0_i32 = arith.constant 0 : i32
    %c0_i32_0 = arith.constant 0 : i32
    %c0_i32_1 = arith.constant 0 : i32
    return %c0_i32, %c0_i32_0 : i32, i32
  }
  func.func @transform_2(%arg0: i32) -> (i32, i32) {
    %c0_i32 = arith.constant 0 : i32
    %c0_i32_0 = arith.constant 0 : i32
    %c0_i32_1 = arith.constant 0 : i32
    return %c0_i32, %c0_i32_0 : i32, i32
  }
  func.func @transform_3(%arg0: i32) -> (i32, i32) {
    %c0_i32 = arith.constant 0 : i32
    %c0_i32_0 = arith.constant 0 : i32
    %c0_i32_1 = arith.constant 0 : i32
    return %c0_i32, %c0_i32_0 : i32, i32
  }
  func.func @transform_4(%arg0: i32) -> (i32, i32) {
    %c0_i32 = arith.constant 0 : i32
    %c0_i32_0 = arith.constant 0 : i32
    %c0_i32_1 = arith.constant 0 : i32
    return %c0_i32, %c0_i32_0 : i32, i32
  }
  func.func @transform_5(%arg0: i32) -> (i32, i32) {
    %c0_i32 = arith.constant 0 : i32
    %c0_i32_0 = arith.constant 0 : i32
    %c0_i32_1 = arith.constant 0 : i32
    return %c0_i32, %c0_i32_0 : i32, i32
  }
  func.func @transform_6(%arg0: i32) -> (i32, i32) {
    %c0_i32 = arith.constant 0 : i32
    %c0_i32_0 = arith.constant 0 : i32
    %c0_i32_1 = arith.constant 0 : i32
    return %c0_i32, %c0_i32_0 : i32, i32
  }
  func.func @transform_7(%arg0: i32) -> (i32, i32, i32) {
    %c0_i32 = arith.constant 0 : i32
    %c0_i32_0 = arith.constant 0 : i32
    %c0_i32_1 = arith.constant 0 : i32
    return %arg0, %c0_i32, %c0_i32_0 : i32, i32, i32
  }
}

</mosaic_0001>

<llo_original>
// kernel: tpu_custom_call.1
$region0: #{tpu_custom_call.1}
  #allocation0 [shape = 'u32[]', space=smem, size = 0x4, offset = 0x4, fixed_abs, tag = 'smem constant byte address 0x4 - core index']
  #allocation1 [shape = 'u32[144,128]{1,0:T(1,128)}', space=vmem, size = 0x12000, scoped, tag = 'internal scratch']
  %s0 = inlined_call_operand.vmem [shape: f32[2,32,16], index: 0, kind: input, shape index: {}]
  %s1 = inlined_call_operand.vmem [shape: f32[32,384], index: 1, kind: input, shape index: {}]
  %s2 = inlined_call_operand.vmem [shape: f32[128,32], index: 2, kind: input, shape index: {}]
  %s3 = inlined_call_operand.vmem [shape: f32[32,1], index: 3, kind: input, shape index: {}]
  %s4 = inlined_call_operand.vmem [shape: f32[32,1], index: 4, kind: input, shape index: {}]
  %s5 = inlined_call_operand.vmem [shape: f32[32,1], index: 5, kind: input, shape index: {}]
  %s6 = inlined_call_operand.vmem [shape: f32[128,128], index: 6, kind: input, shape index: {}]
  %s7 = inlined_call_operand.vmem [shape: f32[2,32,16], index: 7, kind: output, shape index: {}]
  %s8 = sld [smem:[#allocation0]]
  $region61: #{tpu_custom_call.1} parent=0
    _
  %s10 = ssub.s32 1, %s8
  %s11 = scalar_select 0, %s10, %s8
  loop: start=0, step=1, limit=4
  $region2: #{tpu_custom_call.1} parent=0 // loop_pre_header
    _
  $region3: #{tpu_custom_call.1} parent=0 // loop_header
    %s13 = sphi 0, %s17
    %p14 = scmp.ge.s32.totalorder %s13, 4
    %s23 = sphi 0, %s25
    %s26 = sphi 0, %s23
    %s27 = sphi 0, %s26
    %s43 = sphi 0, %s27
    %s47 = sphi 0, %s47
    %s49 = sphi 0, %s47
    %s50 = sphi 0, %s49
    %s64 = sphi 0, %s50
    %s68 = sphi 0, %s68
    %s70 = sphi 0, %s68
    %s71 = sphi 0, %s70
    %s85 = sphi 0, %s71
    %s89 = sphi 0, %s89
    %s91 = sphi 0, %s89
    %s92 = sphi 0, %s91
    %s106 = sphi 0, %s92
    %s110 = sphi 0, %s110
    %s112 = sphi 0, %s110
    %s113 = sphi 0, %s112
    %s127 = sphi 0, %s113
    %s131 = sphi 0, %s131
    %s133 = sphi 0, %s131
    %s134 = sphi 0, %s133
    %s148 = sphi 0, %s134
    %s152 = sphi 0, %s152
    %s154 = sphi 0, %s152
    %s155 = sphi 0, %s154
    %s169 = sphi 0, %s155
    %s175 = sphi 0, %s177
    %s178 = sphi 0, %s175
    %s179 = sphi 0, %s178
    %s195 = sphi 0, %s179
  $region4: #{tpu_custom_call.1} parent=0 // loop_header_branch
    %16 = sbr.rel (%p14) target = $region8
  $region5: #{tpu_custom_call.1} parent=0 // loop_body
    %s18 = ssub.s32 %s13, 1
    %s19 = ssub.s32 %s13, 2
    %s20 = sadd.s32 %s13, 1
    %s21 = ssub.s32 %s13, %s20
    %p22 = scmp.eq.s32.totalorder %s21, 0
    %s24 = sadd.s32 %s23, 1
    %s25 = scalar_select %p22, %s23, %s24
    %p28 = pneg %p22
    %p29 = scmp.eq.s32.totalorder %s13, 1
    %p30 = por %p28, %p29
    %p31 = scmp.ne.s32.totalorder %s23, %s26
    %p32 = scmp.eq.s32.totalorder %s13, 0
    %p33 = por %p31, %p32
    %p34 = scmp.ne.s32.totalorder %s23, %s26
    %p35 = scmp.eq.s32.totalorder %s18, 1
    %p36 = por %p34, %p35
    %p37 = scmp.ne.s32.totalorder %s26, %s27
    %p38 = scmp.eq.s32.totalorder %s18, 0
    %p39 = por %p37, %p38
    %p40 = scmp.ne.s32.totalorder %s26, %s27
    %p41 = scmp.eq.s32.totalorder %s19, 1
    %p42 = por %p40, %p41
    %p44 = scmp.ne.s32.totalorder %s27, %s43
    %p45 = scmp.eq.s32.totalorder %s19, 0
    %p46 = por %p44, %p45
    %s48 = sadd.s32 %s47, 1
    %p51 = scmp.eq.s32.totalorder %s13, 1
    %p52 = scmp.ne.s32.totalorder %s47, %s49
    %p53 = scmp.eq.s32.totalorder %s13, 0
    %p54 = por %p52, %p53
    %p55 = scmp.ne.s32.totalorder %s47, %s49
    %p56 = scmp.eq.s32.totalorder %s18, 1
    %p57 = por %p55, %p56
    %p58 = scmp.ne.s32.totalorder %s49, %s50
    %p59 = scmp.eq.s32.totalorder %s18, 0
    %p60 = por %p58, %p59
    %p61 = scmp.ne.s32.totalorder %s49, %s50
    %p62 = scmp.eq.s32.totalorder %s19, 1
    %p63 = por %p61, %p62
    %p65 = scmp.ne.s32.totalorder %s50, %s64
    %p66 = scmp.eq.s32.totalorder %s19, 0
    %p67 = por %p65, %p66
    %s69 = sadd.s32 %s68, 1
    %p72 = scmp.eq.s32.totalorder %s13, 1
    %p73 = scmp.ne.s32.totalorder %s68, %s70
    %p74 = scmp.eq.s32.totalorder %s13, 0
    %p75 = por %p73, %p74
    %p76 = scmp.ne.s32.totalorder %s68, %s70
    %p77 = scmp.eq.s32.totalorder %s18, 1
    %p78 = por %p76, %p77
    %p79 = scmp.ne.s32.totalorder %s70, %s71
    %p80 = scmp.eq.s32.totalorder %s18, 0
    %p81 = por %p79, %p80
    %p82 = scmp.ne.s32.totalorder %s70, %s71
    %p83 = scmp.eq.s32.totalorder %s19, 1
    %p84 = por %p82, %p83
    %p86 = scmp.ne.s32.totalorder %s71, %s85
    %p87 = scmp.eq.s32.totalorder %s19, 0
    %p88 = por %p86, %p87
    %s90 = sadd.s32 %s89, 1
    %p93 = scmp.eq.s32.totalorder %s13, 1
    %p94 = scmp.ne.s32.totalorder %s89, %s91
    %p95 = scmp.eq.s32.totalorder %s13, 0
    %p96 = por %p94, %p95
    %p97 = scmp.ne.s32.totalorder %s89, %s91
    %p98 = scmp.eq.s32.totalorder %s18, 1
    %p99 = por %p97, %p98
    %p100 = scmp.ne.s32.totalorder %s91, %s92
    %p101 = scmp.eq.s32.totalorder %s18, 0
    %p102 = por %p100, %p101
    %p103 = scmp.ne.s32.totalorder %s91, %s92
    %p104 = scmp.eq.s32.totalorder %s19, 1
    %p105 = por %p103, %p104
    %p107 = scmp.ne.s32.totalorder %s92, %s106
    %p108 = scmp.eq.s32.totalorder %s19, 0
    %p109 = por %p107, %p108
    %s111 = sadd.s32 %s110, 1
    %p114 = scmp.eq.s32.totalorder %s13, 1
    %p115 = scmp.ne.s32.totalorder %s110, %s112
    %p116 = scmp.eq.s32.totalorder %s13, 0
    %p117 = por %p115, %p116
    %p118 = scmp.ne.s32.totalorder %s110, %s112
    %p119 = scmp.eq.s32.totalorder %s18, 1
    %p120 = por %p118, %p119
    %p121 = scmp.ne.s32.totalorder %s112, %s113
    %p122 = scmp.eq.s32.totalorder %s18, 0
    %p123 = por %p121, %p122
    %p124 = scmp.ne.s32.totalorder %s112, %s113
    %p125 = scmp.eq.s32.totalorder %s19, 1
    %p126 = por %p124, %p125
    %p128 = scmp.ne.s32.totalorder %s113, %s127
    %p129 = scmp.eq.s32.totalorder %s19, 0
    %p130 = por %p128, %p129
    %s132 = sadd.s32 %s131, 1
    %p135 = scmp.eq.s32.totalorder %s13, 1
    %p136 = scmp.ne.s32.totalorder %s131, %s133
    %p137 = scmp.eq.s32.totalorder %s13, 0
    %p138 = por %p136, %p137
    %p139 = scmp.ne.s32.totalorder %s131, %s133
    %p140 = scmp.eq.s32.totalorder %s18, 1
    %p141 = por %p139, %p140
    %p142 = scmp.ne.s32.totalorder %s133, %s134
    %p143 = scmp.eq.s32.totalorder %s18, 0
    %p144 = por %p142, %p143
    %p145 = scmp.ne.s32.totalorder %s133, %s134
    %p146 = scmp.eq.s32.totalorder %s19, 1
    %p147 = por %p145, %p146
    %p149 = scmp.ne.s32.totalorder %s134, %s148
    %p150 = scmp.eq.s32.totalorder %s19, 0
    %p151 = por %p149, %p150
    %s153 = sadd.s32 %s152, 1
    %p156 = scmp.eq.s32.totalorder %s13, 1
    %p157 = scmp.ne.s32.totalorder %s152, %s154
    %p158 = scmp.eq.s32.totalorder %s13, 0
    %p159 = por %p157, %p158
    %p160 = scmp.ne.s32.totalorder %s152, %s154
    %p161 = scmp.eq.s32.totalorder %s18, 1
    %p162 = por %p160, %p161
    %p163 = scmp.ne.s32.totalorder %s154, %s155
    %p164 = scmp.eq.s32.totalorder %s18, 0
    %p165 = por %p163, %p164
    %p166 = scmp.ne.s32.totalorder %s154, %s155
    %p167 = scmp.eq.s32.totalorder %s19, 1
    %p168 = por %p166, %p167
    %p170 = scmp.ne.s32.totalorder %s155, %s169
    %p171 = scmp.eq.s32.totalorder %s19, 0
    %p172 = por %p170, %p171
    %s173 = ssub.s32 %s13, %s20
    %p174 = scmp.eq.s32.totalorder %s173, 0
    %s176 = sadd.s32 %s175, 1
    %s177 = scalar_select %p174, %s175, %s176
    %p180 = pneg %p174
    %p181 = scmp.eq.s32.totalorder %s13, 1
    %p182 = por %p180, %p181
    %p183 = scmp.ne.s32.totalorder %s175, %s178
    %p184 = scmp.eq.s32.totalorder %s13, 0
    %p185 = por %p183, %p184
    %p186 = scmp.ne.s32.totalorder %s175, %s178
    %p187 = scmp.eq.s32.totalorder %s18, 1
    %p188 = por %p186, %p187
    %p189 = scmp.ne.s32.totalorder %s178, %s179
    %p190 = scmp.eq.s32.totalorder %s18, 0
    %p191 = por %p189, %p190
    %p192 = scmp.ne.s32.totalorder %s178, %s179
    %p193 = scmp.eq.s32.totalorder %s19, 1
    %p194 = por %p192, %p193
    %p196 = scmp.ne.s32.totalorder %s179, %s195
    %p197 = scmp.eq.s32.totalorder %s19, 0
    %p198 = por %p196, %p197
    %p199 = scmp.le.s32.totalorder 1, %s13
    %p200 = scmp.lt.s32.totalorder %s13, 3
    %p201 = pnand %p199, %p200
    %p202 = pneg %p201
    // Predicated region
    $region9: #{tpu_custom_call.1} parent=5 // pred_check
      _
    $region10: #{tpu_custom_call.1} parent=5 // pred_check_branch
      %204 = sbr.rel (%p201) target = $region12
    $region11: #{tpu_custom_call.1} parent=5 // pred_region
      %s205 = ssub.s32 %s13, 1
      // Predicated region
      $region13: #{tpu_custom_call.1} parent=11 // pred_check
        %p206 = pneg %p60
      $region14: #{tpu_custom_call.1} parent=11 // pred_check_branch
        %208 = sbr.rel (%p206) target = $region16
      $region15: #{tpu_custom_call.1} parent=11 // pred_region
        _
      $region16: #{tpu_custom_call.1} parent=11 // pred_fallthru
        _
      // Predicated region
      $region17: #{tpu_custom_call.1} parent=11 // pred_check
        %p209 = pneg %p81
      $region18: #{tpu_custom_call.1} parent=11 // pred_check_branch
        %211 = sbr.rel (%p209) target = $region20
      $region19: #{tpu_custom_call.1} parent=11 // pred_region
        _
      $region20: #{tpu_custom_call.1} parent=11 // pred_fallthru
        _
      // Predicated region
      $region21: #{tpu_custom_call.1} parent=11 // pred_check
        %p212 = pneg %p102
      $region22: #{tpu_custom_call.1} parent=11 // pred_check_branch
        %214 = sbr.rel (%p212) target = $region24
      $region23: #{tpu_custom_call.1} parent=11 // pred_region
        _
      $region24: #{tpu_custom_call.1} parent=11 // pred_fallthru
        _
      // Predicated region
      $region25: #{tpu_custom_call.1} parent=11 // pred_check
        %p215 = pneg %p123
      $region26: #{tpu_custom_call.1} parent=11 // pred_check_branch
        %217 = sbr.rel (%p215) target = $region28
      $region27: #{tpu_custom_call.1} parent=11 // pred_region
        _
      $region28: #{tpu_custom_call.1} parent=11 // pred_fallthru
        _
      // Predicated region
      $region29: #{tpu_custom_call.1} parent=11 // pred_check
        %p218 = pneg %p144
      $region30: #{tpu_custom_call.1} parent=11 // pred_check_branch
        %220 = sbr.rel (%p218) target = $region32
      $region31: #{tpu_custom_call.1} parent=11 // pred_region
        _
      $region32: #{tpu_custom_call.1} parent=11 // pred_fallthru
        _
      // Predicated region
      $region33: #{tpu_custom_call.1} parent=11 // pred_check
        %p221 = pneg %p165
      $region34: #{tpu_custom_call.1} parent=11 // pred_check_branch
        %223 = sbr.rel (%p221) target = $region36
      $region35: #{tpu_custom_call.1} parent=11 // pred_region
        _
      $region36: #{tpu_custom_call.1} parent=11 // pred_fallthru
        _
    $region12: #{tpu_custom_call.1} parent=5 // pred_fallthru
      _
    %p224 = scmp.lt.s32.totalorder %s13, 2
    // Predicated region
    $region37: #{tpu_custom_call.1} parent=5 // pred_check
      %p225 = pneg %p224
    $region38: #{tpu_custom_call.1} parent=5 // pred_check_branch
      %227 = sbr.rel (%p225) target = $region40
    $region39: #{tpu_custom_call.1} parent=5 // pred_region
      // Predicated region
      $region41: #{tpu_custom_call.1} parent=39 // pred_check
        %p228 = pneg %p33
      $region42: #{tpu_custom_call.1} parent=39 // pred_check_branch
        %230 = sbr.rel (%p228) target = $region44
      $region43: #{tpu_custom_call.1} parent=39 // pred_region
        %p231 = scmp.lt.s32.totalorder %s13, 1
        %s232 = scalar_select %p231, %s13, 1
        %s233 = smul.addr %s232, 4
        %s234 = smul.addr %s233, 8
        %s235 = scalar_lea.vmem %s0, %s234
      $region44: #{tpu_custom_call.1} parent=39 // pred_fallthru
        _
    $region40: #{tpu_custom_call.1} parent=5 // pred_fallthru
      _
    %p236 = scmp.le.s32.totalorder 1, %s13
    %p237 = scmp.lt.s32.totalorder %s13, 3
    %p238 = pnand %p236, %p237
    %p239 = pneg %p238
    // Predicated region
    $region45: #{tpu_custom_call.1} parent=5 // pred_check
      _
    $region46: #{tpu_custom_call.1} parent=5 // pred_check_branch
      %241 = sbr.rel (%p238) target = $region48
    $region47: #{tpu_custom_call.1} parent=5 // pred_region
      %s242 = ssub.s32 %s13, 1
      %p243 = scmp.lt.s32.totalorder %s18, 1
      %s244 = scalar_select %p243, %s18, 1
      %s245 = smul.addr %s244, 4
      %s246 = smul.addr %s245, 8
      %s247 = scalar_lea.vmem %s0, %s246
      %p248 = pneg %p39
      %p249 = pneg %p36
      %p250 = pneg %p60
      %p251 = pneg %p57
      %p252 = pneg %p81
      %p253 = pneg %p78
      %p254 = pneg %p102
      %p255 = pneg %p99
      %p256 = pneg %p123
      %p257 = pneg %p120
      %p258 = pneg %p144
      %p259 = pneg %p141
      %p260 = pneg %p165
      %p261 = pneg %p162
      %p262 = pneg %p191
      %p263 = pneg %p188
      %p264 = scmp.lt.s32.totalorder %s18, 1
      %s265 = scalar_select %p264, %s18, 1
      %s266 = smul.addr %s265, 4
      %s267 = smul.addr %s266, 8
      %s268 = scalar_lea.vmem %s7, %s267
      %p269 = scmp.lt.s32.totalorder %s18, 1
      %s270 = scalar_select %p269, %s18, 1
      %s271 = smul.addr %s270, 4
      %s272 = smul.addr %s271, 8
      %s273 = scalar_lea.vmem %s0, %s272
      %p274 = scmp.lt.s32.totalorder %s18, 1
      %s275 = scalar_select %p274, %s18, 1
      %s276 = smul.addr %s275, 4
      %s277 = smul.addr %s276, 8
      %s278 = scalar_lea.vmem %s7, %s277
      %v279 = vld [vmem:[%s273] sm:$0xff]
      %v280 = vld [vmem:[%s273 + $0x8] sm:$0xff]
      %v281 = vld [vmem:[%s273 + $0x10] sm:$0xff]
      %v282 = vld [vmem:[%s273 + $0x18] sm:$0xff]
      %vm283 = vcmask 130048
      %v284 = vsel %vm283, %v279, 0.0
      %v285 = vsel %vm283, %v280, 0.0
      %v286 = vadd.f32 %v284, %v285
      %v287 = vsel %vm283, %v281, 0.0
      %v288 = vadd.f32 %v286, %v287
      %v289 = vsel %vm283, %v282, 0.0
      %v290 = vadd.f32 %v288, %v289
      %v291 = vrot.slane %v290, 4
      %v292 = vadd.f32 %v290, %v291
      %v293 = vrot.slane %v292, 2
      %v294 = vadd.f32 %v292, %v293
      %v295 = vrot.slane %v294, 1
      %v296 = vadd.f32 %v294, %v295
      %v297 = vrcp.pop 32.0
      %v298 = vmul.f32 %v296, %v297
      %v299 = vsub.f32 %v279, %v298
      %v300 = vsub.f32 %v280, %v298
      %v301 = vsub.f32 %v281, %v298
      %v302 = vsub.f32 %v282, %v298
      %v303 = vmul.f32 %v299, %v299
      %v304 = vmul.f32 %v300, %v300
      %v305 = vmul.f32 %v301, %v301
      %v306 = vmul.f32 %v302, %v302
      %v307 = vsel %vm283, %v303, 0.0
      %v308 = vsel %vm283, %v304, 0.0
      %v309 = vadd.f32 %v307, %v308
      %v310 = vsel %vm283, %v305, 0.0
      %v311 = vadd.f32 %v309, %v310
      %v312 = vsel %vm283, %v306, 0.0
      %v313 = vadd.f32 %v311, %v312
      %v314 = vrot.slane %v313, 4
      %v315 = vadd.f32 %v313, %v314
      %v316 = vrot.slane %v315, 2
      %v317 = vadd.f32 %v315, %v316
      %v318 = vrot.slane %v317, 1
      %v319 = vadd.f32 %v317, %v318
      %v320 = vmul.f32 %v319, %v297
      %v321 = vadd.f32 %v320, 1e-05
      %v322 = vrsqrt.pop %v321
      %v323 = vmul.f32 %v299, %v322
      %v324 = vmul.f32 %v300, %v322
      %v325 = vmul.f32 %v301, %v322
      %v326 = vmul.f32 %v302, %v322
      %v327 = vld [vmem:[%s4] sm:$0xff]
      %v328 = vld [vmem:[%s4 + $0x8] sm:$0xff]
      %v329 = vld [vmem:[%s4 + $0x10] sm:$0xff]
      %v330 = vld [vmem:[%s4 + $0x18] sm:$0xff]
      %332 = vset.pattern.permute.xlu0 0
      %333 = vperm.xlu0 %332, %v327
      %v334 = vpop.permute.xlu0 %333
      %337 = vset.pattern.permute.xlu0 0
      %338 = vperm.xlu0 %337, %v328
      %v339 = vpop.permute.xlu0 %338
      %342 = vset.pattern.permute.xlu0 0
      %343 = vperm.xlu0 %342, %v329
      %v344 = vpop.permute.xlu0 %343
      %347 = vset.pattern.permute.xlu0 0
      %348 = vperm.xlu0 %347, %v330
      %v349 = vpop.permute.xlu0 %348
      %v351 = vmul.f32 %v323, %v334
      %v352 = vmul.f32 %v324, %v339
      %v353 = vmul.f32 %v325, %v344
      %v354 = vmul.f32 %v326, %v349
      %v355 = vld [vmem:[%s5] sm:$0xff]
      %v356 = vld [vmem:[%s5 + $0x8] sm:$0xff]
      %v357 = vld [vmem:[%s5 + $0x10] sm:$0xff]
      %v358 = vld [vmem:[%s5 + $0x18] sm:$0xff]
      %360 = vset.pattern.permute.xlu0 0
      %361 = vperm.xlu0 %360, %v355
      %v362 = vpop.permute.xlu0 %361
      %365 = vset.pattern.permute.xlu0 0
      %366 = vperm.xlu0 %365, %v356
      %v367 = vpop.permute.xlu0 %366
      %370 = vset.pattern.permute.xlu0 0
      %371 = vperm.xlu0 %370, %v357
      %v372 = vpop.permute.xlu0 %371
      %375 = vset.pattern.permute.xlu0 0
      %376 = vperm.xlu0 %375, %v358
      %v377 = vpop.permute.xlu0 %376
      %v379 = vadd.f32 %v351, %v362
      %v380 = vadd.f32 %v352, %v367
      %v381 = vadd.f32 %v353, %v372
      %v382 = vadd.f32 %v354, %v377
      %383 = vxpose.xlu0.b32.start [1/16] %v379, 128
      %384 = vxpose.xlu0.b32.cont [2/16] %v380, 128
      %385 = vxpose.xlu0.b32.cont [3/16] %v381, 128
      %386 = vxpose.xlu0.b32.cont [4/16] %v382, 128
      %387 = vxpose.xlu0.b32.cont [5/16] 0.0, 128
      %388 = vxpose.xlu0.b32.cont [6/16] 0.0, 128
      %389 = vxpose.xlu0.b32.cont [7/16] 0.0, 128
      %390 = vxpose.xlu0.b32.cont [8/16] 0.0, 128
      %391 = vxpose.xlu0.b32.cont [9/16] 0.0, 128
      %392 = vxpose.xlu0.b32.cont [10/16] 0.0, 128
      %393 = vxpose.xlu0.b32.cont [11/16] 0.0, 128
      %394 = vxpose.xlu0.b32.cont [12/16] 0.0, 128
      %395 = vxpose.xlu0.b32.cont [13/16] 0.0, 128
      %396 = vxpose.xlu0.b32.cont [14/16] 0.0, 128
      %397 = vxpose.xlu0.b32.cont [15/16] 0.0, 128
      %398 = vxpose.xlu0.b32.end [16/16] 0.0, 128
      %v399 = vpop.trf.xlu0
      %v400 = vpop.trf.xlu0
      %v401 = vpop.trf.xlu0
      %v402 = vpop.trf.xlu0
      %v403 = vpop.trf.xlu0
      %v404 = vpop.trf.xlu0
      %v405 = vpop.trf.xlu0
      %v406 = vpop.trf.xlu0
      %v407 = vpop.trf.xlu0
      %v408 = vpop.trf.xlu0
      %v409 = vpop.trf.xlu0
      %v410 = vpop.trf.xlu0
      %v411 = vpop.trf.xlu0
      %v412 = vpop.trf.xlu0
      %v413 = vpop.trf.xlu0
      %v414 = vpop.trf.xlu0
      %v415 = vld [vmem:[%s1] sm:$0xff]
      %v416 = vld [vmem:[%s1 + $0x8] sm:$0xff]
      %v417 = vld [vmem:[%s1 + $0x10] sm:$0xff]
      %v418 = vld [vmem:[%s1 + $0x18] sm:$0xff]
      %v419 = vld [vmem:[%s1 + $0x20] sm:$0xff]
      %v420 = vld [vmem:[%s1 + $0x28] sm:$0xff]
      %v421 = vld [vmem:[%s1 + $0x30] sm:$0xff]
      %v422 = vld [vmem:[%s1 + $0x38] sm:$0xff]
      %v423 = vld [vmem:[%s1 + $0x40] sm:$0xff]
      %v424 = vld [vmem:[%s1 + $0x48] sm:$0xff]
      %v425 = vld [vmem:[%s1 + $0x50] sm:$0xff]
      %v426 = vld [vmem:[%s1 + $0x58] sm:$0xff]
      %vm427 = vcmask 261120
      %v429 = vsel %vm427, %v399, 0
      %v432 = vsel %vm427, %v400, 0
      %434 = vmatprep.subr.mxu0 %v416
      %435 = vmatpush1.msra.mxu0 %v415
      %436 = vmatprep.subr.mxu0 %v419
      %437 = vmatpush1.msra.mxu0 %v418
      %438 = vmatprep.subr.mxu0 %v422
      %439 = vmatpush1.msra.mxu0 %v421
      %440 = vmatprep.subr.mxu0 %v425
      %441 = vmatpush1.msra.mxu0 %v424
      %442 = vmatprep.subr.mxu0 0.0
      %443 = vmatpush1.msra.mxu0 0.0
      %444 = vmatprep.subr.mxu0 0.0
      %445 = vmatpush1.msra.mxu0 0.0
      %446 = vmatprep.subr.mxu0 0.0
      %447 = vmatpush1.msra.mxu0 0.0
      %448 = vmatprep.subr.mxu0 0.0
      %449 = vmatpush1.msra.mxu0 0.0
      %450 = vmatprep.subr.mxu0 0.0
      %451 = vmatpush1.msra.mxu0 0.0
      %452 = vmatprep.subr.mxu0 0.0
      %453 = vmatpush1.msra.mxu0 0.0
      %454 = vmatprep.subr.mxu0 0.0
      %455 = vmatpush1.msra.mxu0 0.0
      %456 = vmatprep.subr.mxu0 0.0
      %457 = vmatpush1.msra.mxu0 0.0
      %458 = vmatprep.subr.mxu0 0.0
      %459 = vmatpush1.msra.mxu0 0.0
      %460 = vmatprep.subr.mxu0 0.0
      %461 = vmatpush1.msra.mxu0 0.0
      %462 = vmatprep.subr.mxu0 0.0
      %463 = vmatpush1.msra.mxu0 0.0
      %464 = vmatprep.subr.mxu0 0.0
      %465 = vmatpush1.msra.mxu0 0.0
      %466 = vmatprep.subr.mxu0 0.0
      %467 = vmatpush1.msra.mxu0 0.0
      %468 = vmatprep.subr.mxu0 0.0
      %469 = vmatpush1.msra.mxu0 0.0
      %470 = vmatprep.subr.mxu0 0.0
      %471 = vmatpush1.msra.mxu0 0.0
      %472 = vmatprep.subr.mxu0 0.0
      %473 = vmatpush1.msra.mxu0 0.0
      %474 = vmatprep.subr.mxu0 0.0
      %475 = vmatpush1.msra.mxu0 0.0
      %476 = vmatprep.subr.mxu0 0.0
      %477 = vmatpush1.msra.mxu0 0.0
      %478 = vmatprep.subr.mxu0 0.0
      %479 = vmatpush1.msra.mxu0 0.0
      %480 = vmatprep.subr.mxu0 0.0
      %481 = vmatpush1.msra.mxu0 0.0
      %482 = vmatprep.subr.mxu0 0.0
      %483 = vmatpush1.msra.mxu0 0.0
      %484 = vmatprep.subr.mxu0 0.0
      %485 = vmatpush1.msra.mxu0 0.0
      %486 = vmatprep.subr.mxu0 0.0
      %487 = vmatpush1.msra.mxu0 0.0
      %488 = vmatprep.subr.mxu0 0.0
      %489 = vmatpush1.msra.mxu0 0.0
      %490 = vmatprep.subr.mxu0 0.0
      %491 = vmatpush1.msra.mxu0 0.0
      %492 = vmatprep.subr.mxu0 0.0
      %493 = vmatpush1.msra.mxu0 0.0
      %494 = vmatprep.subr.mxu0 0.0
      %495 = vmatpush1.msra.mxu0 0.0
      %496 = vmatprep.subr.mxu0 0.0
      %497 = vmatpush1.msra.mxu0 0.0
      %498 = vmatprep.mubr.f32.mxu0 0.0
      %499 = vmatmul.mubr.f32.gmra.mrb[0].mxu0 %v429
      %v500 = vpop.f32.mrb[0].mxu0
      %v501 = vadd.f32 0.0, %v500
      %v502 = vpop.f32.mrb[0].mxu0
      %v503 = vadd.f32 0.0, %v502
      %504 = vmatprep.mubr.f32.mxu0 0.0
      %505 = vmatmul.mubr.f32.gmra.mrb[0].mxu0 %v432
      %v506 = vpop.f32.mrb[0].mxu0
      %v507 = vadd.f32 0.0, %v506
      %v508 = vpop.f32.mrb[0].mxu0
      %v509 = vadd.f32 0.0, %v508
      %510 = vdwg.mxu0
      %511 = vmatprep.subr.mxu0 0.0
      %512 = vmatpush1.msra.mxu0 %v417
      %513 = vmatprep.subr.mxu0 0.0
      %514 = vmatpush1.msra.mxu0 %v420
      %515 = vmatprep.subr.mxu0 0.0
      %516 = vmatpush1.msra.mxu0 %v423
      %517 = vmatprep.subr.mxu0 0.0
      %518 = vmatpush1.msra.mxu0 %v426
      %519 = vmatprep.subr.mxu0 0.0
      %520 = vmatpush1.msra.mxu0 0.0
      %521 = vmatprep.subr.mxu0 0.0
      %522 = vmatpush1.msra.mxu0 0.0
      %523 = vmatprep.subr.mxu0 0.0
      %524 = vmatpush1.msra.mxu0 0.0
      %525 = vmatprep.subr.mxu0 0.0
      %526 = vmatpush1.msra.mxu0 0.0
      %527 = vmatprep.subr.mxu0 0.0
      %528 = vmatpush1.msra.mxu0 0.0
      %529 = vmatprep.subr.mxu0 0.0
      %530 = vmatpush1.msra.mxu0 0.0
      %531 = vmatprep.subr.mxu0 0.0
      %532 = vmatpush1.msra.mxu0 0.0
      %533 = vmatprep.subr.mxu0 0.0
      %534 = vmatpush1.msra.mxu0 0.0
      %535 = vmatprep.subr.mxu0 0.0
      %536 = vmatpush1.msra.mxu0 0.0
      %537 = vmatprep.subr.mxu0 0.0
      %538 = vmatpush1.msra.mxu0 0.0
      %539 = vmatprep.subr.mxu0 0.0
      %540 = vmatpush1.msra.mxu0 0.0
      %541 = vmatprep.subr.mxu0 0.0
      %542 = vmatpush1.msra.mxu0 0.0
      %543 = vmatprep.subr.mxu0 0.0
      %544 = vmatpush1.msra.mxu0 0.0
      %545 = vmatprep.subr.mxu0 0.0
      %546 = vmatpush1.msra.mxu0 0.0
      %547 = vmatprep.subr.mxu0 0.0
      %548 = vmatpush1.msra.mxu0 0.0
      %549 = vmatprep.subr.mxu0 0.0
      %550 = vmatpush1.msra.mxu0 0.0
      %551 = vmatprep.subr.mxu0 0.0
      %552 = vmatpush1.msra.mxu0 0.0
      %553 = vmatprep.subr.mxu0 0.0
      %554 = vmatpush1.msra.mxu0 0.0
      %555 = vmatprep.subr.mxu0 0.0
      %556 = vmatpush1.msra.mxu0 0.0
      %557 = vmatprep.subr.mxu0 0.0
      %558 = vmatpush1.msra.mxu0 0.0
      %559 = vmatprep.subr.mxu0 0.0
      %560 = vmatpush1.msra.mxu0 0.0
      %561 = vmatprep.subr.mxu0 0.0
      %562 = vmatpush1.msra.mxu0 0.0
      %563 = vmatprep.subr.mxu0 0.0
      %564 = vmatpush1.msra.mxu0 0.0
      %565 = vmatprep.subr.mxu0 0.0
      %566 = vmatpush1.msra.mxu0 0.0
      %567 = vmatprep.subr.mxu0 0.0
      %568 = vmatpush1.msra.mxu0 0.0
      %569 = vmatprep.subr.mxu0 0.0
      %570 = vmatpush1.msra.mxu0 0.0
      %571 = vmatprep.subr.mxu0 0.0
      %572 = vmatpush1.msra.mxu0 0.0
      %573 = vmatprep.subr.mxu0 0.0
      %574 = vmatpush1.msra.mxu0 0.0
      %575 = vmatprep.mubr.f32.mxu0 0.0
      %576 = vmatmul.mubr.f32.gmra.mrb[0].mxu0 %v429
      %v577 = vpop.f32.mrb[0].mxu0
      %v578 = vadd.f32 0.0, %v577
      %v579 = vpop.f32.mrb[0].mxu0
      %580 = vmatprep.mubr.f32.mxu0 0.0
      %581 = vmatmul.mubr.f32.gmra.mrb[0].mxu0 %v432
      %v582 = vpop.f32.mrb[0].mxu0
      %v583 = vadd.f32 0.0, %v582
      %v584 = vpop.f32.mrb[0].mxu0
      %585 = vdwg.mxu0
      %v586 = vmax.f32 %v503, %v509
      %v587 = vrot.slane %v586, 4
      %v588 = vmax.f32 %v586, %v587
      %v589 = vrot.slane %v588, 2
      %v590 = vmax.f32 %v588, %v589
      %v591 = vrot.slane %v590, 1
      %v592 = vmax.f32 %v590, %v591
      %v593 = vsub.f32 %v503, %v592
      %v594 = vsub.f32 %v509, %v592
      %v595 = vmul.f32 %v593, 1.442695
      %v596 = vpow.pop %v595
      %v597 = vmul.f32 %v594, 1.442695
      %v598 = vpow.pop %v597
      %v599 = vadd.f32 %v596, %v598
      %v600 = vrot.slane %v599, 4
      %v601 = vadd.f32 %v599, %v600
      %v602 = vrot.slane %v601, 2
      %v603 = vadd.f32 %v601, %v602
      %v604 = vrot.slane %v603, 1
      %v605 = vadd.f32 %v603, %v604
      %606 = vxpose.xlu0.b32.start [1/16] %v596, 128
      %607 = vxpose.xlu0.b32.cont [2/16] %v598, 128
      %608 = vxpose.xlu0.b32.cont [3/16] 0.0, 128
      %609 = vxpose.xlu0.b32.cont [4/16] 0.0, 128
      %610 = vxpose.xlu0.b32.cont [5/16] 0.0, 128
      %611 = vxpose.xlu0.b32.cont [6/16] 0.0, 128
      %612 = vxpose.xlu0.b32.cont [7/16] 0.0, 128
      %613 = vxpose.xlu0.b32.cont [8/16] 0.0, 128
      %614 = vxpose.xlu0.b32.cont [9/16] 0.0, 128
      %615 = vxpose.xlu0.b32.cont [10/16] 0.0, 128
      %616 = vxpose.xlu0.b32.cont [11/16] 0.0, 128
      %617 = vxpose.xlu0.b32.cont [12/16] 0.0, 128
      %618 = vxpose.xlu0.b32.cont [13/16] 0.0, 128
      %619 = vxpose.xlu0.b32.cont [14/16] 0.0, 128
      %620 = vxpose.xlu0.b32.cont [15/16] 0.0, 128
      %621 = vxpose.xlu0.b32.end [16/16] 0.0, 128
      %v622 = vpop.trf.xlu0
      %v623 = vpop.trf.xlu0
      %v624 = vpop.trf.xlu0
      %v625 = vpop.trf.xlu0
      %v626 = vpop.trf.xlu0
      %v627 = vpop.trf.xlu0
      %v628 = vpop.trf.xlu0
      %v629 = vpop.trf.xlu0
      %v630 = vpop.trf.xlu0
      %v631 = vpop.trf.xlu0
      %v632 = vpop.trf.xlu0
      %v633 = vpop.trf.xlu0
      %v634 = vpop.trf.xlu0
      %v635 = vpop.trf.xlu0
      %v636 = vpop.trf.xlu0
      %v637 = vpop.trf.xlu0
      %v639 = vsel %vm283, %v622, 0
      %v642 = vsel %vm283, %v623, 0
      %v645 = vsel %vm283, %v624, 0
      %v648 = vsel %vm283, %v625, 0
      %v651 = vsel %vm283, %v626, 0
      %v654 = vsel %vm283, %v627, 0
      %v657 = vsel %vm283, %v628, 0
      %v660 = vsel %vm283, %v629, 0
      %v663 = vsel %vm283, %v630, 0
      %v666 = vsel %vm283, %v631, 0
      %v669 = vsel %vm283, %v632, 0
      %v672 = vsel %vm283, %v633, 0
      %v675 = vsel %vm283, %v634, 0
      %v678 = vsel %vm283, %v635, 0
      %v681 = vsel %vm283, %v636, 0
      %v684 = vsel %vm283, %v637, 0
      %686 = vmatprep.subr.mxu0 0.0
      %687 = vmatpush1.msra.mxu0 %v578
      %688 = vmatprep.subr.mxu0 0.0
      %689 = vmatpush1.msra.mxu0 %v583
      %690 = vmatprep.subr.mxu0 0.0
      %691 = vmatpush1.msra.mxu0 0.0
      %692 = vmatprep.subr.mxu0 0.0
      %693 = vmatpush1.msra.mxu0 0.0
      %694 = vmatprep.subr.mxu0 0.0
      %695 = vmatpush1.msra.mxu0 0.0
      %696 = vmatprep.subr.mxu0 0.0
      %697 = vmatpush1.msra.mxu0 0.0
      %698 = vmatprep.subr.mxu0 0.0
      %699 = vmatpush1.msra.mxu0 0.0
      %700 = vmatprep.subr.mxu0 0.0
      %701 = vmatpush1.msra.mxu0 0.0
      %702 = vmatprep.subr.mxu0 0.0
      %703 = vmatpush1.msra.mxu0 0.0
      %704 = vmatprep.subr.mxu0 0.0
      %705 = vmatpush1.msra.mxu0 0.0
      %706 = vmatprep.subr.mxu0 0.0
      %707 = vmatpush1.msra.mxu0 0.0
      %708 = vmatprep.subr.mxu0 0.0
      %709 = vmatpush1.msra.mxu0 0.0
      %710 = vmatprep.subr.mxu0 0.0
      %711 = vmatpush1.msra.mxu0 0.0
      %712 = vmatprep.subr.mxu0 0.0
      %713 = vmatpush1.msra.mxu0 0.0
      %714 = vmatprep.subr.mxu0 0.0
      %715 = vmatpush1.msra.mxu0 0.0
      %716 = vmatprep.subr.mxu0 0.0
      %717 = vmatpush1.msra.mxu0 0.0
      %718 = vmatprep.subr.mxu0 0.0
      %719 = vmatpush1.msra.mxu0 0.0
      %720 = vmatprep.subr.mxu0 0.0
      %721 = vmatpush1.msra.mxu0 0.0
      %722 = vmatprep.subr.mxu0 0.0
      %723 = vmatpush1.msra.mxu0 0.0
      %724 = vmatprep.subr.mxu0 0.0
      %725 = vmatpush1.msra.mxu0 0.0
      %726 = vmatprep.subr.mxu0 0.0
      %727 = vmatpush1.msra.mxu0 0.0
      %728 = vmatprep.subr.mxu0 0.0
      %729 = vmatpush1.msra.mxu0 0.0
      %730 = vmatprep.subr.mxu0 0.0
      %731 = vmatpush1.msra.mxu0 0.0
      %732 = vmatprep.subr.mxu0 0.0
      %733 = vmatpush1.msra.mxu0 0.0
      %734 = vmatprep.subr.mxu0 0.0
      %735 = vmatpush1.msra.mxu0 0.0
      %736 = vmatprep.subr.mxu0 0.0
      %737 = vmatpush1.msra.mxu0 0.0
      %738 = vmatprep.subr.mxu0 0.0
      %739 = vmatpush1.msra.mxu0 0.0
      %740 = vmatprep.subr.mxu0 0.0
      %741 = vmatpush1.msra.mxu0 0.0
      %742 = vmatprep.subr.mxu0 0.0
      %743 = vmatpush1.msra.mxu0 0.0
      %744 = vmatprep.subr.mxu0 0.0
      %745 = vmatpush1.msra.mxu0 0.0
      %746 = vmatprep.subr.mxu0 0.0
      %747 = vmatpush1.msra.mxu0 0.0
      %748 = vmatprep.subr.mxu0 0.0
      %749 = vmatpush1.msra.mxu0 0.0
      %750 = vmatprep.mubr.f32.mxu0 0.0
      %751 = vmatmul.mubr.f32.gmra.mrb[0].mxu0 %v639
      %v752 = vpop.f32.mrb[0].mxu0
      %v753 = vadd.f32 0.0, %v752
      %v754 = vpop.f32.mrb[0].mxu0
      %755 = vmatprep.mubr.f32.mxu0 0.0
      %756 = vmatmul.mubr.f32.gmra.mrb[0].mxu0 %v642
      %v757 = vpop.f32.mrb[0].mxu0
      %v758 = vadd.f32 0.0, %v757
      %v759 = vpop.f32.mrb[0].mxu0
      %760 = vmatprep.mubr.f32.mxu0 0.0
      %761 = vmatmul.mubr.f32.gmra.mrb[0].mxu0 %v645
      %v762 = vpop.f32.mrb[0].mxu0
      %v763 = vadd.f32 0.0, %v762
      %v764 = vpop.f32.mrb[0].mxu0
      %765 = vmatprep.mubr.f32.mxu0 0.0
      %766 = vmatmul.mubr.f32.gmra.mrb[0].mxu0 %v648
      %v767 = vpop.f32.mrb[0].mxu0
      %v768 = vadd.f32 0.0, %v767
      %v769 = vpop.f32.mrb[0].mxu0
      %770 = vmatprep.mubr.f32.mxu0 0.0
      %771 = vmatmul.mubr.f32.gmra.mrb[0].mxu0 %v651
      %v772 = vpop.f32.mrb[0].mxu0
      %v773 = vadd.f32 0.0, %v772
      %v774 = vpop.f32.mrb[0].mxu0
      %775 = vmatprep.mubr.f32.mxu0 0.0
      %776 = vmatmul.mubr.f32.gmra.mrb[0].mxu0 %v654
      %v777 = vpop.f32.mrb[0].mxu0
      %v778 = vadd.f32 0.0, %v777
      %v779 = vpop.f32.mrb[0].mxu0
      %780 = vmatprep.mubr.f32.mxu0 0.0
      %781 = vmatmul.mubr.f32.gmra.mrb[0].mxu0 %v657
      %v782 = vpop.f32.mrb[0].mxu0
      %v783 = vadd.f32 0.0, %v782
      %v784 = vpop.f32.mrb[0].mxu0
      %785 = vmatprep.mubr.f32.mxu0 0.0
      %786 = vmatmul.mubr.f32.gmra.mrb[0].mxu0 %v660
      %v787 = vpop.f32.mrb[0].mxu0
      %v788 = vadd.f32 0.0, %v787
      %v789 = vpop.f32.mrb[0].mxu0
      %790 = vmatprep.mubr.f32.mxu0 0.0
      %791 = vmatmul.mubr.f32.gmra.mrb[0].mxu0 %v663
      %v792 = vpop.f32.mrb[0].mxu0
      %v793 = vadd.f32 0.0, %v792
      %v794 = vpop.f32.mrb[0].mxu0
      %795 = vmatprep.mubr.f32.mxu0 0.0
      %796 = vmatmul.mubr.f32.gmra.mrb[0].mxu0 %v666
      %v797 = vpop.f32.mrb[0].mxu0
      %v798 = vadd.f32 0.0, %v797
      %v799 = vpop.f32.mrb[0].mxu0
      %800 = vmatprep.mubr.f32.mxu0 0.0
      %801 = vmatmul.mubr.f32.gmra.mrb[0].mxu0 %v669
      %v802 = vpop.f32.mrb[0].mxu0
      %v803 = vadd.f32 0.0, %v802
      %v804 = vpop.f32.mrb[0].mxu0
      %805 = vmatprep.mubr.f32.mxu0 0.0
      %806 = vmatmul.mubr.f32.gmra.mrb[0].mxu0 %v672
      %v807 = vpop.f32.mrb[0].mxu0
      %v808 = vadd.f32 0.0, %v807
      %v809 = vpop.f32.mrb[0].mxu0
      %810 = vmatprep.mubr.f32.mxu0 0.0
      %811 = vmatmul.mubr.f32.gmra.mrb[0].mxu0 %v675
      %v812 = vpop.f32.mrb[0].mxu0
      %v813 = vadd.f32 0.0, %v812
      %v814 = vpop.f32.mrb[0].mxu0
      %815 = vmatprep.mubr.f32.mxu0 0.0
      %816 = vmatmul.mubr.f32.gmra.mrb[0].mxu0 %v678
      %v817 = vpop.f32.mrb[0].mxu0
      %v818 = vadd.f32 0.0, %v817
      %v819 = vpop.f32.mrb[0].mxu0
      %820 = vmatprep.mubr.f32.mxu0 0.0
      %821 = vmatmul.mubr.f32.gmra.mrb[0].mxu0 %v681
      %v822 = vpop.f32.mrb[0].mxu0
      %v823 = vadd.f32 0.0, %v822
      %v824 = vpop.f32.mrb[0].mxu0
      %825 = vmatprep.mubr.f32.mxu0 0.0
      %826 = vmatmul.mubr.f32.gmra.mrb[0].mxu0 %v684
      %v827 = vpop.f32.mrb[0].mxu0
      %v828 = vadd.f32 0.0, %v827
      %v829 = vpop.f32.mrb[0].mxu0
      %830 = vdwg.mxu0
      %831 = vxpose.xlu0.b32.start [1/16] %v605, 128
      %832 = vxpose.xlu0.b32.cont [2/16] 0.0, 128
      %833 = vxpose.xlu0.b32.cont [3/16] 0.0, 128
      %834 = vxpose.xlu0.b32.cont [4/16] 0.0, 128
      %835 = vxpose.xlu0.b32.cont [5/16] 0.0, 128
      %836 = vxpose.xlu0.b32.cont [6/16] 0.0, 128
      %837 = vxpose.xlu0.b32.cont [7/16] 0.0, 128
      %838 = vxpose.xlu0.b32.cont [8/16] 0.0, 128
      %839 = vxpose.xlu0.b32.cont [9/16] 0.0, 128
      %840 = vxpose.xlu0.b32.cont [10/16] 0.0, 128
      %841 = vxpose.xlu0.b32.cont [11/16] 0.0, 128
      %842 = vxpose.xlu0.b32.cont [12/16] 0.0, 128
      %843 = vxpose.xlu0.b32.cont [13/16] 0.0, 128
      %844 = vxpose.xlu0.b32.cont [14/16] 0.0, 128
      %845 = vxpose.xlu0.b32.cont [15/16] 0.0, 128
      %846 = vxpose.xlu0.b32.end [16/16] 0.0, 128
      %v847 = vpop.trf.xlu0
      %v848 = vpop.trf.xlu0
      %v849 = vpop.trf.xlu0
      %v850 = vpop.trf.xlu0
      %v851 = vpop.trf.xlu0
      %v852 = vpop.trf.xlu0
      %v853 = vpop.trf.xlu0
      %v854 = vpop.trf.xlu0
      %v855 = vpop.trf.xlu0
      %v856 = vpop.trf.xlu0
      %v857 = vpop.trf.xlu0
      %v858 = vpop.trf.xlu0
      %v859 = vpop.trf.xlu0
      %v860 = vpop.trf.xlu0
      %v861 = vpop.trf.xlu0
      %v862 = vpop.trf.xlu0
      %v863 = vrcp.pop %v847
      %v864 = vrcp.pop %v848
      %v865 = vrcp.pop %v849
      %v866 = vrcp.pop %v850
      %v867 = vrcp.pop %v851
      %v868 = vrcp.pop %v852
      %v869 = vrcp.pop %v853
      %v870 = vrcp.pop %v854
      %v871 = vrcp.pop %v855
      %v872 = vrcp.pop %v856
      %v873 = vrcp.pop %v857
      %v874 = vrcp.pop %v858
      %v875 = vrcp.pop %v859
      %v876 = vrcp.pop %v860
      %v877 = vrcp.pop %v861
      %v878 = vrcp.pop %v862
      %880 = vset.pattern.permute.xlu0 0
      %881 = vperm.xlu0 %880, %v863
      %v882 = vpop.permute.xlu0 %881
      %885 = vset.pattern.permute.xlu0 0
      %886 = vperm.xlu0 %885, %v864
      %v887 = vpop.permute.xlu0 %886
      %890 = vset.pattern.permute.xlu0 0
      %891 = vperm.xlu0 %890, %v865
      %v892 = vpop.permute.xlu0 %891
      %895 = vset.pattern.permute.xlu0 0
      %896 = vperm.xlu0 %895, %v866
      %v897 = vpop.permute.xlu0 %896
      %900 = vset.pattern.permute.xlu0 0
      %901 = vperm.xlu0 %900, %v867
      %v902 = vpop.permute.xlu0 %901
      %905 = vset.pattern.permute.xlu0 0
      %906 = vperm.xlu0 %905, %v868
      %v907 = vpop.permute.xlu0 %906
      %910 = vset.pattern.permute.xlu0 0
      %911 = vperm.xlu0 %910, %v869
      %v912 = vpop.permute.xlu0 %911
      %915 = vset.pattern.permute.xlu0 0
      %916 = vperm.xlu0 %915, %v870
      %v917 = vpop.permute.xlu0 %916
      %920 = vset.pattern.permute.xlu0 0
      %921 = vperm.xlu0 %920, %v871
      %v922 = vpop.permute.xlu0 %921
      %925 = vset.pattern.permute.xlu0 0
      %926 = vperm.xlu0 %925, %v872
      %v927 = vpop.permute.xlu0 %926
      %930 = vset.pattern.permute.xlu0 0
      %931 = vperm.xlu0 %930, %v873
      %v932 = vpop.permute.xlu0 %931
      %935 = vset.pattern.permute.xlu0 0
      %936 = vperm.xlu0 %935, %v874
      %v937 = vpop.permute.xlu0 %936
      %940 = vset.pattern.permute.xlu0 0
      %941 = vperm.xlu0 %940, %v875
      %v942 = vpop.permute.xlu0 %941
      %945 = vset.pattern.permute.xlu0 0
      %946 = vperm.xlu0 %945, %v876
      %v947 = vpop.permute.xlu0 %946
      %950 = vset.pattern.permute.xlu0 0
      %951 = vperm.xlu0 %950, %v877
      %v952 = vpop.permute.xlu0 %951
      %955 = vset.pattern.permute.xlu0 0
      %956 = vperm.xlu0 %955, %v878
      %v957 = vpop.permute.xlu0 %956
      %v959 = vmul.f32 %v753, %v882
      %v960 = vmul.f32 %v758, %v887
      %v961 = vmul.f32 %v763, %v892
      %v962 = vmul.f32 %v768, %v897
      %v963 = vmul.f32 %v773, %v902
      %v964 = vmul.f32 %v778, %v907
      %v965 = vmul.f32 %v783, %v912
      %v966 = vmul.f32 %v788, %v917
      %v967 = vmul.f32 %v793, %v922
      %v968 = vmul.f32 %v798, %v927
      %v969 = vmul.f32 %v803, %v932
      %v970 = vmul.f32 %v808, %v937
      %v971 = vmul.f32 %v813, %v942
      %v972 = vmul.f32 %v818, %v947
      %v973 = vmul.f32 %v823, %v952
      %v974 = vmul.f32 %v828, %v957
      %v975 = vld [vmem:[%s6] sm:$0xff]
      %v976 = vld [vmem:[%s6 + $0x8] sm:$0xff]
      %v977 = vld [vmem:[%s6 + $0x10] sm:$0xff]
      %v978 = vld [vmem:[%s6 + $0x18] sm:$0xff]
      %v979 = vld [vmem:[%s6 + $0x20] sm:$0xff]
      %v980 = vld [vmem:[%s6 + $0x28] sm:$0xff]
      %v981 = vld [vmem:[%s6 + $0x30] sm:$0xff]
      %v982 = vld [vmem:[%s6 + $0x38] sm:$0xff]
      %v983 = vld [vmem:[%s6 + $0x40] sm:$0xff]
      %v984 = vld [vmem:[%s6 + $0x48] sm:$0xff]
      %v985 = vld [vmem:[%s6 + $0x50] sm:$0xff]
      %v986 = vld [vmem:[%s6 + $0x58] sm:$0xff]
      %v987 = vld [vmem:[%s6 + $0x60] sm:$0xff]
      %v988 = vld [vmem:[%s6 + $0x68] sm:$0xff]
      %v989 = vld [vmem:[%s6 + $0x70] sm:$0xff]
      %v990 = vld [vmem:[%s6 + $0x78] sm:$0xff]
      %v991 = vmul.f32 %v959, %v975
      %v992 = vmul.f32 %v960, %v976
      %v993 = vmul.f32 %v961, %v977
      %v994 = vmul.f32 %v962, %v978
      %v995 = vmul.f32 %v963, %v979
      %v996 = vmul.f32 %v964, %v980
      %v997 = vmul.f32 %v965, %v981
      %v998 = vmul.f32 %v966, %v982
      %v999 = vmul.f32 %v967, %v983
      %v1000 = vmul.f32 %v968, %v984
      %v1001 = vmul.f32 %v969, %v985
      %v1002 = vmul.f32 %v970, %v986
      %v1003 = vmul.f32 %v971, %v987
      %v1004 = vmul.f32 %v972, %v988
      %v1005 = vmul.f32 %v973, %v989
      %v1006 = vmul.f32 %v974, %v990
      %1007 = vmatprep.subr.mxu0 0.0
      %1008 = vmatpush1.msra.mxu0 %v991
      %1009 = vmatprep.subr.mxu0 0.0
      %1010 = vmatpush1.msra.mxu0 %v992
      %1011 = vmatprep.subr.mxu0 0.0
      %1012 = vmatpush1.msra.mxu0 %v993
      %1013 = vmatprep.subr.mxu0 0.0
      %1014 = vmatpush1.msra.mxu0 %v994
      %1015 = vmatprep.subr.mxu0 0.0
      %1016 = vmatpush1.msra.mxu0 %v995
      %1017 = vmatprep.subr.mxu0 0.0
      %1018 = vmatpush1.msra.mxu0 %v996
      %1019 = vmatprep.subr.mxu0 0.0
      %1020 = vmatpush1.msra.mxu0 %v997
      %1021 = vmatprep.subr.mxu0 0.0
      %1022 = vmatpush1.msra.mxu0 %v998
      %1023 = vmatprep.subr.mxu0 0.0
      %1024 = vmatpush1.msra.mxu0 %v999
      %1025 = vmatprep.subr.mxu0 0.0
      %1026 = vmatpush1.msra.mxu0 %v1000
      %1027 = vmatprep.subr.mxu0 0.0
      %1028 = vmatpush1.msra.mxu0 %v1001
      %1029 = vmatprep.subr.mxu0 0.0
      %1030 = vmatpush1.msra.mxu0 %v1002
      %1031 = vmatprep.subr.mxu0 0.0
      %1032 = vmatpush1.msra.mxu0 %v1003
      %1033 = vmatprep.subr.mxu0 0.0
      %1034 = vmatpush1.msra.mxu0 %v1004
      %1035 = vmatprep.subr.mxu0 0.0
      %1036 = vmatpush1.msra.mxu0 %v1005
      %1037 = vmatprep.subr.mxu0 0.0
      %1038 = vmatpush1.msra.mxu0 %v1006
      %1039 = vmatprep.subr.mxu0 0.0
      %1040 = vmatpush1.msra.mxu0 0.0
      %1041 = vmatprep.subr.mxu0 0.0
      %1042 = vmatpush1.msra.mxu0 0.0
      %1043 = vmatprep.subr.mxu0 0.0
      %1044 = vmatpush1.msra.mxu0 0.0
      %1045 = vmatprep.subr.mxu0 0.0
      %1046 = vmatpush1.msra.mxu0 0.0
      %1047 = vmatprep.subr.mxu0 0.0
      %1048 = vmatpush1.msra.mxu0 0.0
      %1049 = vmatprep.subr.mxu0 0.0
      %1050 = vmatpush1.msra.mxu0 0.0
      %1051 = vmatprep.subr.mxu0 0.0
      %1052 = vmatpush1.msra.mxu0 0.0
      %1053 = vmatprep.subr.mxu0 0.0
      %1054 = vmatpush1.msra.mxu0 0.0
      %1055 = vmatprep.subr.mxu0 0.0
      %1056 = vmatpush1.msra.mxu0 0.0
      %1057 = vmatprep.subr.mxu0 0.0
      %1058 = vmatpush1.msra.mxu0 0.0
      %1059 = vmatprep.subr.mxu0 0.0
      %1060 = vmatpush1.msra.mxu0 0.0
      %1061 = vmatprep.subr.mxu0 0.0
      %1062 = vmatpush1.msra.mxu0 0.0
      %1063 = vmatprep.subr.mxu0 0.0
      %1064 = vmatpush1.msra.mxu0 0.0
      %1065 = vmatprep.subr.mxu0 0.0
      %1066 = vmatpush1.msra.mxu0 0.0
      %1067 = vmatprep.subr.mxu0 0.0
      %1068 = vmatpush1.msra.mxu0 0.0
      %1069 = vmatprep.subr.mxu0 0.0
      %1070 = vmatpush1.msra.mxu0 0.0
      %1071 = vmatprep.mubr.f32.mxu0 0.0
      %1072 = vmatmul.mubr.f32.gmra.mrb[0].mxu0 %v501
      %v1073 = vpop.f32.mrb[0].mxu0
      %v1074 = vadd.f32 0.0, %v1073
      %v1075 = vpop.f32.mrb[0].mxu0
      %1076 = vmatprep.mubr.f32.mxu0 0.0
      %1077 = vmatmul.mubr.f32.gmra.mrb[0].mxu0 %v507
      %v1078 = vpop.f32.mrb[0].mxu0
      %v1079 = vadd.f32 0.0, %v1078
      %v1080 = vpop.f32.mrb[0].mxu0
      %1081 = vdwg.mxu0
      %v1082 = vld [vmem:[%s2] sm:$0xff]
      %v1083 = vld [vmem:[%s2 + $0x8] sm:$0xff]
      %v1084 = vld [vmem:[%s2 + $0x10] sm:$0xff]
      %v1085 = vld [vmem:[%s2 + $0x18] sm:$0xff]
      %v1086 = vld [vmem:[%s2 + $0x20] sm:$0xff]
      %v1087 = vld [vmem:[%s2 + $0x28] sm:$0xff]
      %v1088 = vld [vmem:[%s2 + $0x30] sm:$0xff]
      %v1089 = vld [vmem:[%s2 + $0x38] sm:$0xff]
      %v1090 = vld [vmem:[%s2 + $0x40] sm:$0xff]
      %v1091 = vld [vmem:[%s2 + $0x48] sm:$0xff]
      %v1092 = vld [vmem:[%s2 + $0x50] sm:$0xff]
      %v1093 = vld [vmem:[%s2 + $0x58] sm:$0xff]
      %v1094 = vld [vmem:[%s2 + $0x60] sm:$0xff]
      %v1095 = vld [vmem:[%s2 + $0x68] sm:$0xff]
      %v1096 = vld [vmem:[%s2 + $0x70] sm:$0xff]
      %v1097 = vld [vmem:[%s2 + $0x78] sm:$0xff]
      %1098 = vmatprep.subr.mxu0 0.0
      %1099 = vmatpush1.msra.mxu0 %v1082
      %1100 = vmatprep.subr.mxu0 0.0
      %1101 = vmatpush1.msra.mxu0 %v1083
      %1102 = vmatprep.subr.mxu0 0.0
      %1103 = vmatpush1.msra.mxu0 %v1084
      %1104 = vmatprep.subr.mxu0 0.0
      %1105 = vmatpush1.msra.mxu0 %v1085
      %1106 = vmatprep.subr.mxu0 0.0
      %1107 = vmatpush1.msra.mxu0 %v1086
      %1108 = vmatprep.subr.mxu0 0.0
      %1109 = vmatpush1.msra.mxu0 %v1087
      %1110 = vmatprep.subr.mxu0 0.0
      %1111 = vmatpush1.msra.mxu0 %v1088
      %1112 = vmatprep.subr.mxu0 0.0
      %1113 = vmatpush1.msra.mxu0 %v1089
      %1114 = vmatprep.subr.mxu0 0.0
      %1115 = vmatpush1.msra.mxu0 %v1090
      %1116 = vmatprep.subr.mxu0 0.0
      %1117 = vmatpush1.msra.mxu0 %v1091
      %1118 = vmatprep.subr.mxu0 0.0
      %1119 = vmatpush1.msra.mxu0 %v1092
      %1120 = vmatprep.subr.mxu0 0.0
      %1121 = vmatpush1.msra.mxu0 %v1093
      %1122 = vmatprep.subr.mxu0 0.0
      %1123 = vmatpush1.msra.mxu0 %v1094
      %1124 = vmatprep.subr.mxu0 0.0
      %1125 = vmatpush1.msra.mxu0 %v1095
      %1126 = vmatprep.subr.mxu0 0.0
      %1127 = vmatpush1.msra.mxu0 %v1096
      %1128 = vmatprep.subr.mxu0 0.0
      %1129 = vmatpush1.msra.mxu0 %v1097
      %1130 = vmatprep.subr.mxu0 0.0
      %1131 = vmatpush1.msra.mxu0 0.0
      %1132 = vmatprep.subr.mxu0 0.0
      %1133 = vmatpush1.msra.mxu0 0.0
      %1134 = vmatprep.subr.mxu0 0.0
      %1135 = vmatpush1.msra.mxu0 0.0
      %1136 = vmatprep.subr.mxu0 0.0
      %1137 = vmatpush1.msra.mxu0 0.0
      %1138 = vmatprep.subr.mxu0 0.0
      %1139 = vmatpush1.msra.mxu0 0.0
      %1140 = vmatprep.subr.mxu0 0.0
      %1141 = vmatpush1.msra.mxu0 0.0
      %1142 = vmatprep.subr.mxu0 0.0
      %1143 = vmatpush1.msra.mxu0 0.0
      %1144 = vmatprep.subr.mxu0 0.0
      %1145 = vmatpush1.msra.mxu0 0.0
      %1146 = vmatprep.subr.mxu0 0.0
      %1147 = vmatpush1.msra.mxu0 0.0
      %1148 = vmatprep.subr.mxu0 0.0
      %1149 = vmatpush1.msra.mxu0 0.0
      %1150 = vmatprep.subr.mxu0 0.0
      %1151 = vmatpush1.msra.mxu0 0.0
      %1152 = vmatprep.subr.mxu0 0.0
      %1153 = vmatpush1.msra.mxu0 0.0
      %1154 = vmatprep.subr.mxu0 0.0
      %1155 = vmatpush1.msra.mxu0 0.0
      %1156 = vmatprep.subr.mxu0 0.0
      %1157 = vmatpush1.msra.mxu0 0.0
      %1158 = vmatprep.subr.mxu0 0.0
      %1159 = vmatpush1.msra.mxu0 0.0
      %1160 = vmatprep.subr.mxu0 0.0
      %1161 = vmatpush1.msra.mxu0 0.0
      %1162 = vmatprep.mubr.f32.mxu0 0.0
      %1163 = vmatmul.mubr.f32.gmra.mrb[0].mxu0 %v1074
      %v1164 = vpop.f32.mrb[0].mxu0
      %v1165 = vadd.f32 0.0, %v1164
      %v1166 = vpop.f32.mrb[0].mxu0
      %1167 = vmatprep.mubr.f32.mxu0 0.0
      %1168 = vmatmul.mubr.f32.gmra.mrb[0].mxu0 %v1079
      %v1169 = vpop.f32.mrb[0].mxu0
      %v1170 = vadd.f32 0.0, %v1169
      %v1171 = vpop.f32.mrb[0].mxu0
      %1172 = vdwg.mxu0
      %1173 = vxpose.xlu0.b32.start [1/16] %v1165, 128
      %1174 = vxpose.xlu0.b32.cont [2/16] %v1170, 128
      %1175 = vxpose.xlu0.b32.cont [3/16] 0.0, 128
      %1176 = vxpose.xlu0.b32.cont [4/16] 0.0, 128
      %1177 = vxpose.xlu0.b32.cont [5/16] 0.0, 128
      %1178 = vxpose.xlu0.b32.cont [6/16] 0.0, 128
      %1179 = vxpose.xlu0.b32.cont [7/16] 0.0, 128
      %1180 = vxpose.xlu0.b32.cont [8/16] 0.0, 128
      %1181 = vxpose.xlu0.b32.cont [9/16] 0.0, 128
      %1182 = vxpose.xlu0.b32.cont [10/16] 0.0, 128
      %1183 = vxpose.xlu0.b32.cont [11/16] 0.0, 128
      %1184 = vxpose.xlu0.b32.cont [12/16] 0.0, 128
      %1185 = vxpose.xlu0.b32.cont [13/16] 0.0, 128
      %1186 = vxpose.xlu0.b32.cont [14/16] 0.0, 128
      %1187 = vxpose.xlu0.b32.cont [15/16] 0.0, 128
      %1188 = vxpose.xlu0.b32.end [16/16] 0.0, 128
      %v1189 = vpop.trf.xlu0
      %v1190 = vpop.trf.xlu0
      %v1191 = vpop.trf.xlu0
      %v1192 = vpop.trf.xlu0
      %v1193 = vpop.trf.xlu0
      %v1194 = vpop.trf.xlu0
      %v1195 = vpop.trf.xlu0
      %v1196 = vpop.trf.xlu0
      %v1197 = vpop.trf.xlu0
      %v1198 = vpop.trf.xlu0
      %v1199 = vpop.trf.xlu0
      %v1200 = vpop.trf.xlu0
      %v1201 = vpop.trf.xlu0
      %v1202 = vpop.trf.xlu0
      %v1203 = vpop.trf.xlu0
      %v1204 = vpop.trf.xlu0
      %v1205 = vld [vmem:[%s3] sm:$0xff]
      %v1206 = vld [vmem:[%s3 + $0x8] sm:$0xff]
      %v1207 = vld [vmem:[%s3 + $0x10] sm:$0xff]
      %v1208 = vld [vmem:[%s3 + $0x18] sm:$0xff]
      %1210 = vset.pattern.permute.xlu0 0
      %1211 = vperm.xlu0 %1210, %v1205
      %v1212 = vpop.permute.xlu0 %1211
      %1215 = vset.pattern.permute.xlu0 0
      %1216 = vperm.xlu0 %1215, %v1206
      %v1217 = vpop.permute.xlu0 %1216
      %1220 = vset.pattern.permute.xlu0 0
      %1221 = vperm.xlu0 %1220, %v1207
      %v1222 = vpop.permute.xlu0 %1221
      %1225 = vset.pattern.permute.xlu0 0
      %1226 = vperm.xlu0 %1225, %v1208
      %v1227 = vpop.permute.xlu0 %1226
      %v1229 = vadd.f32 %v1189, %v1212
      %v1230 = vadd.f32 %v1190, %v1217
      %v1231 = vadd.f32 %v1191, %v1222
      %v1232 = vadd.f32 %v1192, %v1227
      %v1233 = vadd.f32 %v1229, %v279
      %v1234 = vadd.f32 %v1230, %v280
      %v1235 = vadd.f32 %v1231, %v281
      %v1236 = vadd.f32 %v1232, %v282
      %1237 = vst.msk [vmem:[%s278] sm:$0xff] %vm283, %v1233
      %1238 = vst.msk [vmem:[%s278 + $0x8] sm:$0xff] %vm283, %v1234
      %1239 = vst.msk [vmem:[%s278 + $0x10] sm:$0xff] %vm283, %v1235
      %1240 = vst.msk [vmem:[%s278 + $0x18] sm:$0xff] %vm283, %v1236
      %p1241 = scmp.lt.s32.totalorder %s18, 1
      %s1242 = scalar_select %p1241, %s18, 1
      %s1243 = smul.addr %s1242, 4
      %s1244 = smul.addr %s1243, 8
      %s1245 = scalar_lea.vmem %s7, %s1244
      // Predicated region
      $region49: #{tpu_custom_call.1} parent=47 // pred_check
        %p1246 = pneg %p188
      $region50: #{tpu_custom_call.1} parent=47 // pred_check_branch
        %1248 = sbr.rel (%p1246) target = $region52
      $region51: #{tpu_custom_call.1} parent=47 // pred_region
        _
      $region52: #{tpu_custom_call.1} parent=47 // pred_fallthru
        _
    $region48: #{tpu_custom_call.1} parent=5 // pred_fallthru
      _
    %p1249 = scmp.le.s32.totalorder 2, %s13
    // Predicated region
    $region53: #{tpu_custom_call.1} parent=5 // pred_check
      %p1250 = pneg %p1249
    $region54: #{tpu_custom_call.1} parent=5 // pred_check_branch
      %1252 = sbr.rel (%p1250) target = $region56
    $region55: #{tpu_custom_call.1} parent=5 // pred_region
      %s1253 = ssub.s32 %s13, 2
      // Predicated region
      $region57: #{tpu_custom_call.1} parent=55 // pred_check
        %p1254 = pneg %p194
      $region58: #{tpu_custom_call.1} parent=55 // pred_check_branch
        %1256 = sbr.rel (%p1254) target = $region60
      $region59: #{tpu_custom_call.1} parent=55 // pred_region
        %p1257 = scmp.lt.s32.totalorder %s19, 1
        %s1258 = scalar_select %p1257, %s19, 1
        %s1259 = smul.addr %s1258, 4
        %s1260 = smul.addr %s1259, 8
        %s1261 = scalar_lea.vmem %s7, %s1260
      $region60: #{tpu_custom_call.1} parent=55 // pred_fallthru
        _
    $region56: #{tpu_custom_call.1} parent=5 // pred_fallthru
      _
  $region6: #{tpu_custom_call.1} parent=0 // loop_footer
    %s17 = sadd.s32 1, %s13
  $region7: #{tpu_custom_call.1} parent=0 // loop_footer_branch
    %12 = sbr.rel target = $region3
  $region8: #{tpu_custom_call.1} parent=0 // loop_exit
    _

</llo_original>
